<compile_context>
chip_gen: v6e
topology: v6e:2x2x1
jax: 0.10.0
libtpu: 0.0.40
codegen_flags: <defaults>
</compile_context>

<pallas_src>
import jax
import jax.numpy as jnp
from jax.experimental import pallas as pl
from jax.experimental.pallas import tpu as pltpu


def _round_up(x, m):
    return ((x + m - 1) // m) * m


def _vmem_limit_bytes(estimate):
    # Headroom above the estimate, but stay inside every generation's physical
    # VMEM (64 MiB on v7x, 128 MiB on v5e/v6e).
    return int(min(100 * 1024 * 1024, max(32 * 1024 * 1024, int(1.5 * estimate))))


# -----------------------------------------------------------------------------
# Fused path: full vocab resident in VMEM, single pass.
# -----------------------------------------------------------------------------
def _fused_generator_kernel(inv_temp_ref, x_ref, w_ref, b_ref, out_ref):
    """One row tile of log_softmax((x @ W + b) * inv_temp, axis=-1)."""
    inv_temp = inv_temp_ref[0]
    logits = jnp.dot(x_ref[...], w_ref[...], preferred_element_type=jnp.float32)
    logits = (logits + b_ref[...]) * inv_temp
    m = jnp.max(logits, axis=-1, keepdims=True)
    shifted = logits - m
    lse = jnp.log(jnp.sum(jnp.exp(shifted), axis=-1, keepdims=True))
    out_ref[...] = (shifted - lse).astype(out_ref.dtype)


def _fused_forward(inv_temp, x2, w_hv, b_row, out_dtype, tm):
    rows, H = x2.shape
    V = w_hv.shape[1]
    est = H * V * 2 + 2 * tm * H * 2 + 2 * V * 4 + 4 * tm * V * 4

    def build(single_buffer_consts):
        const_kw = ({"pipeline_mode": pl.Buffered(1)} if single_buffer_consts else {})
        return pl.pallas_call(
            _fused_generator_kernel,
            out_shape=jax.ShapeDtypeStruct((rows, V), out_dtype),
            grid=(rows // tm,),
            in_specs=[
                pl.BlockSpec(memory_space=pltpu.SMEM),                 # inv_temp
                pl.BlockSpec((tm, H), lambda i: (i, 0)),               # x row tile
                pl.BlockSpec((H, V), lambda i: (0, 0), **const_kw),    # resident weight
                pl.BlockSpec((1, V), lambda i: (0, 0), **const_kw),    # bias
            ],
            out_specs=pl.BlockSpec((tm, V), lambda i: (i, 0)),
            compiler_params=pltpu.CompilerParams(
                dimension_semantics=("parallel",),
                vmem_limit_bytes=_vmem_limit_bytes(est)),
        )

    try:
        return build(True)(inv_temp, x2, w_hv, b_row)
    except Exception:
        # Fallback if this JAX build rejects single-buffered constant specs.
        return build(False)(inv_temp, x2, w_hv, b_row)


# -----------------------------------------------------------------------------
# Vocab-tiled path: online log-sum-exp over vocab tiles + finalize kernel.
# -----------------------------------------------------------------------------
def _logits_lse_kernel(inv_temp_ref, x_ref, w_ref, b_ref,
                       logits_ref, lse_ref, m_sc, l_sc):
    j = pl.program_id(1)

    @pl.when(j == 0)
    def _():
        m_sc[...] = jnp.full_like(m_sc, -jnp.inf)
        l_sc[...] = jnp.zeros_like(l_sc)

    logits = jnp.dot(x_ref[...], w_ref[...], preferred_element_type=jnp.float32)
    logits = (logits + b_ref[...]) * inv_temp_ref[0]
    logits_ref[...] = logits

    m_new = jnp.maximum(m_sc[...], jnp.max(logits, axis=-1, keepdims=True))
    alpha = jnp.exp(m_sc[...] - m_new)
    l_sc[...] = alpha * l_sc[...] + jnp.sum(jnp.exp(logits - m_new),
                                            axis=-1, keepdims=True)
    m_sc[...] = m_new

    @pl.when(j == pl.num_programs(1) - 1)
    def _():
        lse_ref[...] = m_sc[...] + jnp.log(l_sc[...])


def _finalize_kernel(logits_ref, lse_ref, out_ref):
    out_ref[...] = (logits_ref[...] - lse_ref[...]).astype(out_ref.dtype)


def _tiled_forward(inv_temp, x2, w_hv, b_row, out_dtype, tm, tv):
    rows, H = x2.shape
    V = w_hv.shape[1]

    tv_eff = min(tv, _round_up(V, 128))
    tv_eff = max(128, (tv_eff // 128) * 128)
    V_p = _round_up(V, tv_eff)
    if V_p != V:
        # Pad vocab with zero weights and a very negative bias so padded
        # columns contribute exp(...) == 0 to the log-sum-exp.
        w_hv = jnp.pad(w_hv, ((0, 0), (0, V_p - V)))
        b_row = jnp.pad(b_row, ((0, 0), (0, V_p - V)), constant_values=-1e30)

    grid = (rows // tm, V_p // tv_eff)
    est = (2 * H * tv_eff * 2 + 2 * tm * H * 2 + 2 * tv_eff * 4
           + 4 * tm * tv_eff * 4 + 2 * tm * 4)
    limit = _vmem_limit_bytes(est)

    logits, lse = pl.pallas_call(
        _logits_lse_kernel,
        out_shape=(jax.ShapeDtypeStruct((rows, V_p), jnp.float32),
                   jax.ShapeDtypeStruct((rows, 1), jnp.float32)),
        grid=grid,
        in_specs=[
            pl.BlockSpec(memory_space=pltpu.SMEM),                  # inv_temp
            pl.BlockSpec((tm, H), lambda i, j: (i, 0)),             # x row tile
            pl.BlockSpec((H, tv_eff), lambda i, j: (0, j)),         # weight vocab tile
            pl.BlockSpec((1, tv_eff), lambda i, j: (0, j)),         # bias vocab tile
        ],
        out_specs=(pl.BlockSpec((tm, tv_eff), lambda i, j: (i, j)),  # scaled logits
                   pl.BlockSpec((tm, 1), lambda i, j: (i, 0))),      # per-row LSE
        scratch_shapes=[pltpu.VMEM((tm, 1), jnp.float32),            # running max
                        pltpu.VMEM((tm, 1), jnp.float32)],           # running sum
        compiler_params=pltpu.CompilerParams(
            dimension_semantics=("parallel", "arbitrary"),
            vmem_limit_bytes=limit),
    )(inv_temp, x2, w_hv, b_row)

    out = pl.pallas_call(
        _finalize_kernel,
        out_shape=jax.ShapeDtypeStruct((rows, V_p), out_dtype),
        grid=grid,
        in_specs=[pl.BlockSpec((tm, tv_eff), lambda i, j: (i, j)),
                  pl.BlockSpec((tm, 1), lambda i, j: (i, 0))],
        out_specs=pl.BlockSpec((tm, tv_eff), lambda i, j: (i, j)),
        compiler_params=pltpu.CompilerParams(
            dimension_semantics=("parallel", "parallel"),
            vmem_limit_bytes=limit),
    )(logits, lse)

    return out[:, :V] if V_p != V else out


# -----------------------------------------------------------------------------
# Public API
# -----------------------------------------------------------------------------
def prepare_generator_params(weight, bias):
    """One-time prep outside the hot path:
    PyTorch nn.Linear weight (V, H) -> (H, V) bf16 MXU operand; bias -> (1, V) f32."""
    w_hv = jnp.asarray(weight).T.astype(jnp.bfloat16)
    b_row = jnp.asarray(bias, jnp.float32).reshape(1, -1)
    return w_hv, b_row


def generator_forward(decoder_output, w_hv, bias_row, temperature=1.0, *,
                      tm=256, tv=2048, out_dtype=jnp.float32,
                      vocab_tiled=None,
                      fused_vmem_budget_bytes=44 * 1024 * 1024):
    """
    decoder_output : (B, S, H)  float32/bfloat16
    w_hv           : (H, V)     bf16 (from prepare_generator_params)
    bias_row       : (1, V) or (V,) float32
    returns        : (B, S, V)  log-probabilities (out_dtype)
    """
    B, S, H = decoder_output.shape
    assert w_hv.shape[0] == H, "weight must be prepared as (hidden, vocab)"
    V = w_hv.shape[1]
    rows = B * S

    if w_hv.dtype != jnp.bfloat16:
        w_hv = w_hv.astype(jnp.bfloat16)
    b_row = jnp.asarray(bias_row, jnp.float32).reshape(1, V)
    inv_temp = (1.0 / jnp.asarray(temperature, jnp.float32)).reshape(1)

    x2 = decoder_output.reshape(rows, H).astype(jnp.bfloat16)

    # Row tile: as large as possible (MXU occupancy, per-step overhead), but a
    # multiple of 8 sublanes and not larger than the padded row count.
    tm_eff = min(tm, _round_up(rows, 8))
    tm_eff = max(8, (tm_eff // 8) * 8)
    rows_p = _round_up(rows, tm_eff)
    if rows_p != rows:
        x2 = jnp.pad(x2, ((0, rows_p - rows), (0, 0)))

    if vocab_tiled is None:
        fused_est = H * V * 2 + 2 * tm_eff * H * 2 + 2 * V * 4 + 4 * tm_eff * V * 4
        vocab_tiled = fused_est > fused_vmem_budget_bytes

    if vocab_tiled:
        out = _tiled_forward(inv_temp, x2, w_hv, b_row, out_dtype, tm_eff, tv)
    else:
        out = _fused_forward(inv_temp, x2, w_hv, b_row, out_dtype, tm_eff)

    if rows_p != rows:
        out = out[:rows]
    return out.reshape(B, S, V)


if __name__ == "__main__":
    # Small shapes consistent with the module's forward:
    # decoder_output: [batch, max_seq_len, hidden_dim]
    B, S, H, V = 2, 8, 32, 512
    key = jax.random.PRNGKey(0)
    kx, kw, kb = jax.random.split(key, 3)

    x = jax.random.normal(kx, (B, S, H), dtype=jnp.float32)
    bound = 1.0 / (H ** 0.5)
    weight = jax.random.uniform(kw, (V, H), minval=-bound, maxval=bound, dtype=jnp.float32)
    bias = jax.random.uniform(kb, (V,), minval=-bound, maxval=bound, dtype=jnp.float32)
    temperature = 0.7

    w_hv, b_row = prepare_generator_params(weight, bias)

    # Fused path (weight fully VMEM-resident): fast path for small/medium V.
    out_fused = jax.block_until_ready(
        generator_forward(x, w_hv, b_row, temperature, vocab_tiled=False))
    # Vocab-tiled online-LSE path: the large-V / v7x (64 MiB VMEM) path.
    out_tiled = jax.block_until_ready(
        generator_forward(x, w_hv, b_row, temperature, vocab_tiled=True, tv=128))

    # Pure-JAX reference on the same bf16-rounded operands the MXU consumes.
    xr = x.astype(jnp.bfloat16).astype(jnp.float32)
    wr = w_hv.astype(jnp.float32)  # (H, V)
    ref_logits = (jnp.einsum("bsh,hv->bsv", xr, wr,
                             precision=jax.lax.Precision.HIGHEST) + bias) / temperature
    ref = jax.nn.log_softmax(ref_logits, axis=-1)

    assert out_fused.shape == (B, S, V) and out_tiled.shape == (B, S, V)
    assert jnp.allclose(out_fused, ref, atol=2e-3, rtol=2e-3)
    assert jnp.allclose(out_tiled, ref, atol=2e-3, rtol=2e-3)

    print("KERNEL_OK")
</pallas_src>

<mosaic_0001>
module attributes {stable_mosaic.version = 11 : i64} {
  func.func @_fused_generator_kernel(%arg0: i32, %arg1: memref<1xf32, #tpu.memory_space<smem>>, %arg2: memref<16x32xbf16, #tpu.memory_space<vmem>>, %arg3: memref<32x512xbf16, #tpu.memory_space<vmem>>, %arg4: memref<1x512xf32, #tpu.memory_space<vmem>>, %arg5: memref<16x512xf32, #tpu.memory_space<vmem>>) attributes {dimension_semantics = [#tpu.dimension_semantics<parallel>], iteration_bounds = array<i64: 1>, scalar_prefetch = 0 : i64, scratch_operands = 0 : i64, tpu.core_type = #tpu.core_type<tc>, window_params = [{transform_indices = @transform_0, window_bounds = array<i64: 1>}, {transform_indices = @transform_1, window_bounds = array<i64: 16, 32>}, {pipeline_mode = #tpu.pipeline_mode<synchronous>, transform_indices = @transform_2, window_bounds = array<i64: 32, 512>}, {pipeline_mode = #tpu.pipeline_mode<synchronous>, transform_indices = @transform_3, window_bounds = array<i64: 1, 512>}, {transform_indices = @transform_4, window_bounds = array<i64: 16, 512>}]} {
    %c0 = arith.constant 0 : index
    %0 = memref.load %arg1[%c0] : memref<1xf32, #tpu.memory_space<smem>>
    %c0_0 = arith.constant 0 : index
    %c0_1 = arith.constant 0 : index
    %1 = vector.load %arg2[%c0_0, %c0_1] : memref<16x32xbf16, #tpu.memory_space<vmem>>, vector<16x32xbf16>
    %c0_2 = arith.constant 0 : index
    %c0_3 = arith.constant 0 : index
    %2 = vector.load %arg3[%c0_2, %c0_3] : memref<32x512xbf16, #tpu.memory_space<vmem>>, vector<32x512xbf16>
    %cst = arith.constant dense<0.000000e+00> : vector<16x512xf32>
    %3 = tpu.matmul %1, %2, %cst {dimension_numbers = #tpu.dot_dimension_numbers<[1], [0], [0], [1], [0, 0, 1, 1], [], []>} : vector<16x32xbf16>, vector<32x512xbf16>, vector<16x512xf32> -> vector<16x512xf32>
    %c0_4 = arith.constant 0 : index
    %c0_5 = arith.constant 0 : index
    %4 = vector.load %arg4[%c0_4, %c0_5] : memref<1x512xf32, #tpu.memory_space<vmem>>, vector<1x512xf32>
    %5 = vector.broadcast %4 : vector<1x512xf32> to vector<16x512xf32>
    %6 = arith.addf %3, %5 : vector<16x512xf32>
    %7 = vector.broadcast %0 : f32 to vector<16x512xf32>
    %8 = arith.mulf %6, %7 : vector<16x512xf32>
    %cst_6 = arith.constant dense<0xFF800000> : vector<16xf32>
    %9 = vector.multi_reduction <maximumf>, %8, %cst_6 [1] : vector<16x512xf32> to vector<16xf32>
    %10 = vector.shape_cast %9 : vector<16xf32> to vector<16x1xf32>
    %11 = vector.broadcast %10 : vector<16x1xf32> to vector<16x512xf32>
    %12 = arith.subf %8, %11 : vector<16x512xf32>
    %13 = math.exp %12 : vector<16x512xf32>
    %cst_7 = arith.constant dense<0.000000e+00> : vector<16xf32>
    %14 = vector.multi_reduction <add>, %13, %cst_7 [1] : vector<16x512xf32> to vector<16xf32>
    %15 = vector.shape_cast %14 : vector<16xf32> to vector<16x1xf32>
    %16 = math.log %15 : vector<16x1xf32>
    %17 = vector.broadcast %16 : vector<16x1xf32> to vector<16x512xf32>
    %18 = arith.subf %12, %17 : vector<16x512xf32>
    %c0_8 = arith.constant 0 : index
    %c0_9 = arith.constant 0 : index
    %19 = vector.load %arg5[%c0_8, %c0_9] : memref<16x512xf32, #tpu.memory_space<vmem>>, vector<16x512xf32>
    tpu.vector_store %arg5[%c0_8, %c0_9], %18 {strides = array<i32>} : memref<16x512xf32, #tpu.memory_space<vmem>>, vector<16x512xf32>,
    return
  }
  func.func @transform_0(%arg0: i32) -> i32 {
    %c0_i32 = arith.constant 0 : i32
    %c0_i32_0 = arith.constant 0 : i32
    return %c0_i32 : i32
  }
  func.func @transform_1(%arg0: i32) -> (i32, i32) {
    %c0_i32 = arith.constant 0 : i32
    %c0_i32_0 = arith.constant 0 : i32
    return %arg0, %c0_i32 : i32, i32
  }
  func.func @transform_2(%arg0: i32) -> (i32, i32) {
    %c0_i32 = arith.constant 0 : i32
    %c0_i32_0 = arith.constant 0 : i32
    %c0_i32_1 = arith.constant 0 : i32
    return %c0_i32, %c0_i32_0 : i32, i32
  }
  func.func @transform_3(%arg0: i32) -> (i32, i32) {
    %c0_i32 = arith.constant 0 : i32
    %c0_i32_0 = arith.constant 0 : i32
    %c0_i32_1 = arith.constant 0 : i32
    return %c0_i32, %c0_i32_0 : i32, i32
  }
  func.func @transform_4(%arg0: i32) -> (i32, i32) {
    %c0_i32 = arith.constant 0 : i32
    %c0_i32_0 = arith.constant 0 : i32
    return %arg0, %c0_i32 : i32, i32
  }
}

module attributes {stable_mosaic.version = 11 : i64} {
  func.func @_fused_generator_kernel(%arg0: i32, %arg1: memref<1xf32, #tpu.memory_space<smem>>, %arg2: memref<16x32xbf16, #tpu.memory_space<vmem>>, %arg3: memref<32x512xbf16, #tpu.memory_space<vmem>>, %arg4: memref<1x512xf32, #tpu.memory_space<vmem>>, %arg5: memref<16x512xf32, #tpu.memory_space<vmem>>) attributes {dimension_semantics = [#tpu.dimension_semantics<parallel>], iteration_bounds = array<i64: 1>, scalar_prefetch = 0 : i64, scratch_operands = 0 : i64, tpu.core_type = #tpu.core_type<tc>, window_params = [{transform_indices = @transform_0, window_bounds = array<i64: 1>}, {transform_indices = @transform_1, window_bounds = array<i64: 16, 32>}, {pipeline_mode = #tpu.pipeline_mode<synchronous>, transform_indices = @transform_2, window_bounds = array<i64: 32, 512>}, {pipeline_mode = #tpu.pipeline_mode<synchronous>, transform_indices = @transform_3, window_bounds = array<i64: 1, 512>}, {transform_indices = @transform_4, window_bounds = array<i64: 16, 512>}]} {
    %c0 = arith.constant 0 : index
    %0 = memref.load %arg1[%c0] : memref<1xf32, #tpu.memory_space<smem>>
    %c0_0 = arith.constant 0 : index
    %c0_1 = arith.constant 0 : index
    %1 = vector.load %arg2[%c0_0, %c0_1] : memref<16x32xbf16, #tpu.memory_space<vmem>>, vector<16x32xbf16>
    %c0_2 = arith.constant 0 : index
    %c0_3 = arith.constant 0 : index
    %2 = vector.load %arg3[%c0_2, %c0_3] : memref<32x512xbf16, #tpu.memory_space<vmem>>, vector<32x512xbf16>
    %cst = arith.constant dense<0.000000e+00> : vector<16x512xf32>
    %3 = tpu.matmul %1, %2, %cst {dimension_numbers = #tpu.dot_dimension_numbers<[1], [0], [0], [1], [0, 0, 1, 1], [], []>} : vector<16x32xbf16>, vector<32x512xbf16>, vector<16x512xf32> -> vector<16x512xf32>
    %c0_4 = arith.constant 0 : index
    %c0_5 = arith.constant 0 : index
    %4 = vector.load %arg4[%c0_4, %c0_5] : memref<1x512xf32, #tpu.memory_space<vmem>>, vector<1x512xf32>
    %5 = vector.broadcast %4 : vector<1x512xf32> to vector<16x512xf32>
    %6 = arith.addf %3, %5 : vector<16x512xf32>
    %7 = vector.broadcast %0 : f32 to vector<16x512xf32>
    %8 = arith.mulf %6, %7 : vector<16x512xf32>
    %cst_6 = arith.constant dense<0xFF800000> : vector<16xf32>
    %9 = vector.multi_reduction <maximumf>, %8, %cst_6 [1] : vector<16x512xf32> to vector<16xf32>
    %10 = vector.shape_cast %9 : vector<16xf32> to vector<16x1xf32>
    %11 = vector.broadcast %10 : vector<16x1xf32> to vector<16x512xf32>
    %12 = arith.subf %8, %11 : vector<16x512xf32>
    %13 = math.exp %12 : vector<16x512xf32>
    %cst_7 = arith.constant dense<0.000000e+00> : vector<16xf32>
    %14 = vector.multi_reduction <add>, %13, %cst_7 [1] : vector<16x512xf32> to vector<16xf32>
    %15 = vector.shape_cast %14 : vector<16xf32> to vector<16x1xf32>
    %16 = math.log %15 : vector<16x1xf32>
    %17 = vector.broadcast %16 : vector<16x1xf32> to vector<16x512xf32>
    %18 = arith.subf %12, %17 : vector<16x512xf32>
    %c0_8 = arith.constant 0 : index
    %c0_9 = arith.constant 0 : index
    %19 = vector.load %arg5[%c0_8, %c0_9] : memref<16x512xf32, #tpu.memory_space<vmem>>, vector<16x512xf32>
    tpu.vector_store %arg5[%c0_8, %c0_9], %18 {strides = array<i32>} : memref<16x512xf32, #tpu.memory_space<vmem>>, vector<16x512xf32>,
    return
  }
  func.func @transform_0(%arg0: i32) -> i32 {
    %c0_i32 = arith.constant 0 : i32
    %c0_i32_0 = arith.constant 0 : i32
    return %c0_i32 : i32
  }
  func.func @transform_1(%arg0: i32) -> (i32, i32) {
    %c0_i32 = arith.constant 0 : i32
    %c0_i32_0 = arith.constant 0 : i32
    return %arg0, %c0_i32 : i32, i32
  }
  func.func @transform_2(%arg0: i32) -> (i32, i32) {
    %c0_i32 = arith.constant 0 : i32
    %c0_i32_0 = arith.constant 0 : i32
    %c0_i32_1 = arith.constant 0 : i32
    return %c0_i32, %c0_i32_0 : i32, i32
  }
  func.func @transform_3(%arg0: i32) -> (i32, i32) {
    %c0_i32 = arith.constant 0 : i32
    %c0_i32_0 = arith.constant 0 : i32
    %c0_i32_1 = arith.constant 0 : i32
    return %c0_i32, %c0_i32_0 : i32, i32
  }
  func.func @transform_4(%arg0: i32) -> (i32, i32) {
    %c0_i32 = arith.constant 0 : i32
    %c0_i32_0 = arith.constant 0 : i32
    return %arg0, %c0_i32 : i32, i32
  }
}

</mosaic_0001>

<llo_original>
// kernel: tpu_custom_call.1
$region0: #{tpu_custom_call.1}
  #allocation0 [shape = 'u32[]', space=smem, size = 0x4, offset = 0x4, fixed_abs, tag = 'smem constant byte address 0x4 - core index']
  #allocation1 [shape = 'u32[144,128]{1,0:T(1,128)}', space=vmem, size = 0x12000, scoped, tag = 'internal scratch']
  #allocation2 [shape = 'f32[1]{0:T(128)S(6)}', space=smem, size = 0x200, scoped, tag = 'scoped memory for tpu_custom_call.1']
  %s0 = inlined_call_operand.<no memory space> [shape: f32[1], index: 0, kind: input, shape index: {}]
  %s1 = inlined_call_operand.hbm [shape: bf16[16,32], index: 1, kind: input, shape index: {}]
  %s2 = inlined_call_operand.hbm [shape: bf16[32,512], index: 2, kind: input, shape index: {}]
  %s3 = inlined_call_operand.vmem [shape: f32[1,512], index: 3, kind: input, shape index: {}]
  %s4 = inlined_call_operand.hbm [shape: f32[16,512], index: 4, kind: output, shape index: {}]
  %s5 = sld [smem:[#allocation0]]
  $region34: #{tpu_custom_call.1} parent=0
    _
  %s7 = ssub.s32 1, %s5
  %s8 = scalar_select 0, %s7, %s5
  %9 = sst [smem:[#allocation2]] %s0
  $region1: #{tpu_custom_call.1} parent=0
    #allocation3 [shape = 'u8[4096]{0}', space=vmem, size = 0x1000, scoped, tag = 'input window, operand 1, single buffered']
    #allocation4 [shape = 's32[1]{0}', space=sflag, size = 0x4, scoped, tag = 'scoped memory for tpu_custom_call.1']
    #allocation5 [shape = 's32[1]{0}', space=sflag, size = 0x4, scoped, tag = 'scoped memory for tpu_custom_call.1']
    #allocation6 [shape = 'u8[32768]{0}', space=vmem, size = 0x8000, scoped, tag = 'input window, operand 2, single buffered']
    #allocation7 [shape = 's32[1]{0}', space=sflag, size = 0x4, scoped, tag = 'scoped memory for tpu_custom_call.1']
    #allocation8 [shape = 'u8[32768]{0}', space=vmem, size = 0x8000, scoped, tag = 'output window, operand 0, single buffered']
    %10 = vsyncpa [#allocation4], 0
    %11 = vsyncpa [#allocation7], 0
    %12 = vsyncpa [#allocation5], 0
    // Predicated region
    $region2: #{tpu_custom_call.1} parent=1 // pred_check
      _
    $region3: #{tpu_custom_call.1} parent=1 // pred_check_branch
      %14 = sbr.rel (0) target = $region5
    $region4: #{tpu_custom_call.1} parent=1 // pred_region
      _
    $region5: #{tpu_custom_call.1} parent=1 // pred_fallthru
      _
    // Predicated region
    $region6: #{tpu_custom_call.1} parent=1 // pred_check
      _
    $region7: #{tpu_custom_call.1} parent=1 // pred_check_branch
      %16 = sbr.rel (0) target = $region9
    $region8: #{tpu_custom_call.1} parent=1 // pred_region
      %s18 = ssub.s32 128, 128
      %19 = vsyncadd [#allocation4], %s18
      %s20 = sshll.u32 [#allocation3], 4
      %s21 = int_to_ptr.vmem [resolvable:$true] %s20
      %26 = dma.hbm_to_vmem [thread:$0]  %s1, 128, %s21, [#allocation4], 64, 64, 4
    $region9: #{tpu_custom_call.1} parent=1 // pred_fallthru
      _
    // Predicated region
    $region10: #{tpu_custom_call.1} parent=1 // pred_check
      _
    $region11: #{tpu_custom_call.1} parent=1 // pred_check_branch
      %28 = sbr.rel (0) target = $region13
    $region12: #{tpu_custom_call.1} parent=1 // pred_region
      %s30 = ssub.s32 1024, 1024
      %31 = vsyncadd [#allocation7], %s30
      %s32 = sshll.u32 [#allocation6], 4
      %s33 = int_to_ptr.vmem [resolvable:$true] %s32
      %38 = dma.hbm_to_vmem [thread:$0]  %s2, 1024, %s33, [#allocation7], 256, 256, 16
    $region13: #{tpu_custom_call.1} parent=1 // pred_fallthru
      _
    // Predicated region
    $region14: #{tpu_custom_call.1} parent=1 // pred_check
      _
    $region15: #{tpu_custom_call.1} parent=1 // pred_check_branch
      %40 = sbr.rel (0) target = $region17
    $region16: #{tpu_custom_call.1} parent=1 // pred_region
      _
    $region17: #{tpu_custom_call.1} parent=1 // pred_fallthru
      _
    // Predicated region
    $region18: #{tpu_custom_call.1} parent=1 // pred_check
      _
    $region19: #{tpu_custom_call.1} parent=1 // pred_check_branch
      %42 = sbr.rel (0) target = $region21
    $region20: #{tpu_custom_call.1} parent=1 // pred_region
      %43 = dma.done [#allocation4], 128
    $region21: #{tpu_custom_call.1} parent=1 // pred_fallthru
      _
    // Predicated region
    $region22: #{tpu_custom_call.1} parent=1 // pred_check
      _
    $region23: #{tpu_custom_call.1} parent=1 // pred_check_branch
      %45 = sbr.rel (0) target = $region25
    $region24: #{tpu_custom_call.1} parent=1 // pred_region
      %46 = dma.done [#allocation7], 1024
    $region25: #{tpu_custom_call.1} parent=1 // pred_fallthru
      _
    %s48 = sld [smem:[#allocation2]]
    %v49 = vld [vmem:[#allocation3] sm:$0xf]
    %v50 = vld [vmem:[#allocation3 + $0x4] sm:$0xf]
    %v51 = vld [vmem:[#allocation6] sm:$0xff]
    %v52 = vld [vmem:[#allocation6 + $0x8] sm:$0xff]
    %v53 = vld [vmem:[#allocation6 + $0x10] sm:$0xff]
    %v54 = vld [vmem:[#allocation6 + $0x18] sm:$0xff]
    %v55 = vld [vmem:[#allocation6 + $0x20] sm:$0xff]
    %v56 = vld [vmem:[#allocation6 + $0x28] sm:$0xff]
    %v57 = vld [vmem:[#allocation6 + $0x30] sm:$0xff]
    %v58 = vld [vmem:[#allocation6 + $0x38] sm:$0xff]
    %v59 = vld [vmem:[%s3] sm:$0xf]
    %v61 = vlaneseq
    %v62 = vshrl.u32 %v61, 7
    %v63 = vsub.s32 0, %v62
    %v64 = vrot.slane %v59, %v63
    %v65 = vlaneseq
    %v66 = vshrl.u32 %v65, 7
    %v67 = vsub.s32 1, %v66
    %v68 = vrot.slane %v59, %v67
    %v69 = vlaneseq
    %v70 = vshrl.u32 %v69, 7
    %v71 = vsub.s32 2, %v70
    %v72 = vrot.slane %v59, %v71
    %v73 = vlaneseq
    %v74 = vshrl.u32 %v73, 7
    %v75 = vsub.s32 3, %v74
    %v76 = vrot.slane %v59, %v75
    %v83 = vunpack.c.l.b16 %v49
    %v84 = vunpack.c.l.b16 %v50
    %v85 = vpack.c.b16 %v84, %v83
    %v94 = vunpack.c.l.b16 %v51
    %v95 = vunpack.c.h.b16 %v51
    %v96 = vunpack.c.l.b16 %v52
    %v97 = vunpack.c.h.b16 %v52
    %v98 = vunpack.c.l.b16 %v53
    %v99 = vunpack.c.h.b16 %v53
    %v100 = vunpack.c.l.b16 %v54
    %v101 = vunpack.c.h.b16 %v54
    %v102 = vunpack.c.l.b16 %v55
    %v103 = vunpack.c.h.b16 %v55
    %v104 = vunpack.c.l.b16 %v56
    %v105 = vunpack.c.h.b16 %v56
    %v106 = vunpack.c.l.b16 %v57
    %v107 = vunpack.c.h.b16 %v57
    %v108 = vunpack.c.l.b16 %v58
    %v109 = vunpack.c.h.b16 %v58
    %v110 = vpack.c.b16 %v98, %v94
    %v111 = vpack.c.b16 %v99, %v95
    %v112 = vpack.c.b16 %v100, %v96
    %v113 = vpack.c.b16 %v101, %v97
    %v114 = vpack.c.b16 %v106, %v102
    %v115 = vpack.c.b16 %v107, %v103
    %v116 = vpack.c.b16 %v108, %v104
    %v117 = vpack.c.b16 %v109, %v105
    %vm126 = vcmask 261120
    %v128 = vsel %vm126, %v85, 0
    %130 = vmatprep.subr.bf16.mxu0 0
    %131 = vmatpush1.bf16.msra.mxu0 0
    %132 = vmatprep.subr.bf16.mxu0 0
    %133 = vmatpush1.bf16.msra.mxu0 0
    %134 = vmatprep.subr.bf16.mxu0 0
    %135 = vmatpush1.bf16.msra.mxu0 0
    %136 = vmatprep.subr.bf16.mxu0 0
    %137 = vmatpush1.bf16.msra.mxu0 0
    %138 = vmatprep.subr.bf16.mxu0 0
    %139 = vmatpush1.bf16.msra.mxu0 0
    %140 = vmatprep.subr.bf16.mxu0 0
    %141 = vmatpush1.bf16.msra.mxu0 0
    %142 = vmatprep.subr.bf16.mxu0 %v115
    %143 = vmatpush1.bf16.msra.mxu0 %v114
    %144 = vmatprep.subr.bf16.mxu0 %v111
    %145 = vmatpush1.bf16.msra.mxu0 %v110
    %146 = vmatprep.subr.bf16.mxu0 0
    %147 = vmatpush2.bf16.msra.mxu0 0
    %148 = vmatprep.subr.bf16.mxu0 0
    %149 = vmatpush2.bf16.msra.mxu0 0
    %150 = vmatprep.subr.bf16.mxu0 0
    %151 = vmatpush2.bf16.msra.mxu0 0
    %152 = vmatprep.subr.bf16.mxu0 0
    %153 = vmatpush2.bf16.msra.mxu0 0
    %154 = vmatprep.subr.bf16.mxu0 0
    %155 = vmatpush2.bf16.msra.mxu0 0
    %156 = vmatprep.subr.bf16.mxu0 0
    %157 = vmatpush2.bf16.msra.mxu0 0
    %158 = vmatprep.subr.bf16.mxu0 0
    %159 = vmatpush2.bf16.msra.mxu0 0
    %160 = vmatprep.subr.bf16.mxu0 0
    %161 = vmatpush2.bf16.msra.mxu0 0
    %162 = vmatprep.mubr.bf16.mxu0 0
    %163 = vmatmul.mubr.bf16.gmra.mxu0 %v128
    %v164 = vpop.f32.mrf.mxu0
    %v165 = vadd.f32 %v64, %v164
    %v166 = vpop.f32.mrf.mxu0
    %v167 = vadd.f32 %v68, %v166
    %v168 = vpop.f32.mrf.mxu0
    %v169 = vadd.f32 %v64, %v168
    %v170 = vpop.f32.mrf.mxu0
    %v171 = vadd.f32 %v68, %v170
    %172 = vdwg.mxu0
    %173 = vmatprep.subr.bf16.mxu0 0
    %174 = vmatpush1.bf16.msra.mxu0 0
    %175 = vmatprep.subr.bf16.mxu0 0
    %176 = vmatpush1.bf16.msra.mxu0 0
    %177 = vmatprep.subr.bf16.mxu0 0
    %178 = vmatpush1.bf16.msra.mxu0 0
    %179 = vmatprep.subr.bf16.mxu0 0
    %180 = vmatpush1.bf16.msra.mxu0 0
    %181 = vmatprep.subr.bf16.mxu0 0
    %182 = vmatpush1.bf16.msra.mxu0 0
    %183 = vmatprep.subr.bf16.mxu0 0
    %184 = vmatpush1.bf16.msra.mxu0 0
    %185 = vmatprep.subr.bf16.mxu0 %v117
    %186 = vmatpush1.bf16.msra.mxu0 %v116
    %187 = vmatprep.subr.bf16.mxu0 %v113
    %188 = vmatpush1.bf16.msra.mxu0 %v112
    %189 = vmatprep.subr.bf16.mxu0 0
    %190 = vmatpush2.bf16.msra.mxu0 0
    %191 = vmatprep.subr.bf16.mxu0 0
    %192 = vmatpush2.bf16.msra.mxu0 0
    %193 = vmatprep.subr.bf16.mxu0 0
    %194 = vmatpush2.bf16.msra.mxu0 0
    %195 = vmatprep.subr.bf16.mxu0 0
    %196 = vmatpush2.bf16.msra.mxu0 0
    %197 = vmatprep.subr.bf16.mxu0 0
    %198 = vmatpush2.bf16.msra.mxu0 0
    %199 = vmatprep.subr.bf16.mxu0 0
    %200 = vmatpush2.bf16.msra.mxu0 0
    %201 = vmatprep.subr.bf16.mxu0 0
    %202 = vmatpush2.bf16.msra.mxu0 0
    %203 = vmatprep.subr.bf16.mxu0 0
    %204 = vmatpush2.bf16.msra.mxu0 0
    %205 = vmatprep.mubr.bf16.mxu0 0
    %206 = vmatmul.mubr.bf16.gmra.mxu0 %v128
    %v207 = vpop.f32.mrf.mxu0
    %v208 = vadd.f32 %v72, %v207
    %v209 = vpop.f32.mrf.mxu0
    %v210 = vadd.f32 %v76, %v209
    %v211 = vpop.f32.mrf.mxu0
    %v212 = vadd.f32 %v72, %v211
    %v213 = vpop.f32.mrf.mxu0
    %v214 = vadd.f32 %v76, %v213
    %215 = vdwg.mxu0
    %v216 = vstv %s48
    %v217 = vmul.f32 %v165, %v216
    %v218 = vmul.f32 %v167, %v216
    %v219 = vmul.f32 %v208, %v216
    %v220 = vmul.f32 %v210, %v216
    %v221 = vmul.f32 %v169, %v216
    %v222 = vmul.f32 %v171, %v216
    %v223 = vmul.f32 %v212, %v216
    %v224 = vmul.f32 %v214, %v216
    %v225 = vmax.f32 %v217, %v219
    %v226 = vmax.f32 %v218, %v220
    %v227 = vmax.f32 %v225, %v226
    %228 = vmax.xlane.f32.xlu0 %v227
    %v229 = vpop.xlane.xlu0 %228
    %v230 = vmax.f32 %v221, %v223
    %v231 = vmax.f32 %v222, %v224
    %v232 = vmax.f32 %v230, %v231
    %233 = vmax.xlane.f32.xlu0 %v232
    %v234 = vpop.xlane.xlu0 %233
    %v235 = vsub.f32 %v217, %v229
    %v236 = vsub.f32 %v218, %v229
    %v237 = vsub.f32 %v219, %v229
    %v238 = vsub.f32 %v220, %v229
    %v239 = vsub.f32 %v221, %v234
    %v240 = vsub.f32 %v222, %v234
    %v241 = vsub.f32 %v223, %v234
    %v242 = vsub.f32 %v224, %v234
    %v243 = vmul.f32 %v235, 1.442695
    %v244 = vpow.pop %v243
    %v245 = vmul.f32 %v236, 1.442695
    %v246 = vpow.pop %v245
    %v247 = vmul.f32 %v237, 1.442695
    %v248 = vpow.pop %v247
    %v249 = vmul.f32 %v238, 1.442695
    %v250 = vpow.pop %v249
    %v251 = vmul.f32 %v239, 1.442695
    %v252 = vpow.pop %v251
    %v253 = vmul.f32 %v240, 1.442695
    %v254 = vpow.pop %v253
    %v255 = vmul.f32 %v241, 1.442695
    %v256 = vpow.pop %v255
    %v257 = vmul.f32 %v242, 1.442695
    %v258 = vpow.pop %v257
    %v259 = vadd.f32 %v244, %v246
    %v260 = vadd.f32 %v259, %v248
    %v261 = vadd.f32 %v260, %v250
    %262 = vadd.xlane.f32.xlu0 %v261
    %v263 = vpop.xlane.xlu0 %262
    %v264 = vadd.f32 %v252, %v254
    %v265 = vadd.f32 %v264, %v256
    %v266 = vadd.f32 %v265, %v258
    %267 = vadd.xlane.f32.xlu0 %v266
    %v268 = vpop.xlane.xlu0 %267
    %v269 = vlog2.pop %v263
    %v270 = vmul.f32 %v269, 0.6931472
    %v271 = vlog2.pop %v268
    %v272 = vmul.f32 %v271, 0.6931472
    %v273 = vsub.f32 %v235, %v270
    %v274 = vsub.f32 %v236, %v270
    %v275 = vsub.f32 %v237, %v270
    %v276 = vsub.f32 %v238, %v270
    %v277 = vsub.f32 %v239, %v272
    %v278 = vsub.f32 %v240, %v272
    %v279 = vsub.f32 %v241, %v272
    %v280 = vsub.f32 %v242, %v272
    %281 = vst [vmem:[#allocation8] sm:$0xff] %v273
    %282 = vst [vmem:[#allocation8 + $0x8] sm:$0xff] %v274
    %283 = vst [vmem:[#allocation8 + $0x10] sm:$0xff] %v275
    %284 = vst [vmem:[#allocation8 + $0x18] sm:$0xff] %v276
    %285 = vst [vmem:[#allocation8 + $0x20] sm:$0xff] %v277
    %286 = vst [vmem:[#allocation8 + $0x28] sm:$0xff] %v278
    %287 = vst [vmem:[#allocation8 + $0x30] sm:$0xff] %v279
    %288 = vst [vmem:[#allocation8 + $0x38] sm:$0xff] %v280
    // Predicated region
    $region26: #{tpu_custom_call.1} parent=1 // pred_check
      _
    $region27: #{tpu_custom_call.1} parent=1 // pred_check_branch
      %290 = sbr.rel (0) target = $region29
    $region28: #{tpu_custom_call.1} parent=1 // pred_region
      %s292 = ssub.s32 1024, 1024
      %293 = vsyncadd [#allocation5], %s292
      %s294 = sshll.u32 [#allocation8], 4
      %s295 = int_to_ptr.vmem [resolvable:$true] %s294
      %300 = dma.vmem_to_hbm [thread:$0]  %s295, 1024, %s4, [#allocation5], 512, 512, 32
    $region29: #{tpu_custom_call.1} parent=1 // pred_fallthru
      _
    // Predicated region
    $region30: #{tpu_custom_call.1} parent=1 // pred_check
      _
    $region31: #{tpu_custom_call.1} parent=1 // pred_check_branch
      %302 = sbr.rel (0) target = $region33
    $region32: #{tpu_custom_call.1} parent=1 // pred_region
      %303 = dma.done [#allocation5], 1024
    $region33: #{tpu_custom_call.1} parent=1 // pred_fallthru
      _
    %304 = vsyncpa [#allocation4], 1
    %305 = vsyncpa [#allocation7], 1
    %306 = vsyncpa [#allocation5], 1

// kernel: tpu_custom_call.1
$region0: #{tpu_custom_call.1}
  #allocation0 [shape = 'u32[]', space=smem, size = 0x4, offset = 0x4, fixed_abs, tag = 'smem constant byte address 0x4 - core index']
  #allocation1 [shape = 'u32[144,128]{1,0:T(1,128)}', space=vmem, size = 0x12000, scoped, tag = 'internal scratch']
  #allocation2 [shape = 'f32[1]{0:T(128)S(6)}', space=smem, size = 0x200, scoped, tag = 'scoped memory for tpu_custom_call.1']
  %s0 = inlined_call_operand.<no memory space> [shape: f32[1], index: 0, kind: input, shape index: {}]
  %s1 = inlined_call_operand.hbm [shape: bf16[16,32], index: 1, kind: input, shape index: {}]
  %s2 = inlined_call_operand.hbm [shape: bf16[32,512], index: 2, kind: input, shape index: {}]
  %s3 = inlined_call_operand.vmem [shape: f32[1,512], index: 3, kind: input, shape index: {}]
  %s4 = inlined_call_operand.hbm [shape: f32[16,512], index: 4, kind: output, shape index: {}]
  %s5 = sld [smem:[#allocation0]]
  $region34: #{tpu_custom_call.1} parent=0
    _
  %s7 = ssub.s32 1, %s5
  %s8 = scalar_select 0, %s7, %s5
  %9 = sst [smem:[#allocation2]] %s0
  $region1: #{tpu_custom_call.1} parent=0
    #allocation3 [shape = 'u8[4096]{0}', space=vmem, size = 0x1000, scoped, tag = 'input window, operand 1, single buffered']
    #allocation4 [shape = 's32[1]{0}', space=sflag, size = 0x4, scoped, tag = 'scoped memory for tpu_custom_call.1']
    #allocation5 [shape = 's32[1]{0}', space=sflag, size = 0x4, scoped, tag = 'scoped memory for tpu_custom_call.1']
    #allocation6 [shape = 'u8[32768]{0}', space=vmem, size = 0x8000, scoped, tag = 'input window, operand 2, single buffered']
    #allocation7 [shape = 's32[1]{0}', space=sflag, size = 0x4, scoped, tag = 'scoped memory for tpu_custom_call.1']
    #allocation8 [shape = 'u8[32768]{0}', space=vmem, size = 0x8000, scoped, tag = 'output window, operand 0, single buffered']
    %10 = vsyncpa [#allocation4], 0
    %11 = vsyncpa [#allocation7], 0
    %12 = vsyncpa [#allocation5], 0
    // Predicated region
    $region2: #{tpu_custom_call.1} parent=1 // pred_check
      _
    $region3: #{tpu_custom_call.1} parent=1 // pred_check_branch
      %14 = sbr.rel (0) target = $region5
    $region4: #{tpu_custom_call.1} parent=1 // pred_region
      _
    $region5: #{tpu_custom_call.1} parent=1 // pred_fallthru
      _
    // Predicated region
    $region6: #{tpu_custom_call.1} parent=1 // pred_check
      _
    $region7: #{tpu_custom_call.1} parent=1 // pred_check_branch
      %16 = sbr.rel (0) target = $region9
    $region8: #{tpu_custom_call.1} parent=1 // pred_region
      %s18 = ssub.s32 128, 128
      %19 = vsyncadd [#allocation4], %s18
      %s20 = sshll.u32 [#allocation3], 4
      %s21 = int_to_ptr.vmem [resolvable:$true] %s20
      %26 = dma.hbm_to_vmem [thread:$0]  %s1, 128, %s21, [#allocation4], 64, 64, 4
    $region9: #{tpu_custom_call.1} parent=1 // pred_fallthru
      _
    // Predicated region
    $region10: #{tpu_custom_call.1} parent=1 // pred_check
      _
    $region11: #{tpu_custom_call.1} parent=1 // pred_check_branch
      %28 = sbr.rel (0) target = $region13
    $region12: #{tpu_custom_call.1} parent=1 // pred_region
      %s30 = ssub.s32 1024, 1024
      %31 = vsyncadd [#allocation7], %s30
      %s32 = sshll.u32 [#allocation6], 4
      %s33 = int_to_ptr.vmem [resolvable:$true] %s32
      %38 = dma.hbm_to_vmem [thread:$0]  %s2, 1024, %s33, [#allocation7], 256, 256, 16
    $region13: #{tpu_custom_call.1} parent=1 // pred_fallthru
      _
    // Predicated region
    $region14: #{tpu_custom_call.1} parent=1 // pred_check
      _
    $region15: #{tpu_custom_call.1} parent=1 // pred_check_branch
      %40 = sbr.rel (0) target = $region17
    $region16: #{tpu_custom_call.1} parent=1 // pred_region
      _
    $region17: #{tpu_custom_call.1} parent=1 // pred_fallthru
      _
    // Predicated region
    $region18: #{tpu_custom_call.1} parent=1 // pred_check
      _
    $region19: #{tpu_custom_call.1} parent=1 // pred_check_branch
      %42 = sbr.rel (0) target = $region21
    $region20: #{tpu_custom_call.1} parent=1 // pred_region
      %43 = dma.done [#allocation4], 128
    $region21: #{tpu_custom_call.1} parent=1 // pred_fallthru
      _
    // Predicated region
    $region22: #{tpu_custom_call.1} parent=1 // pred_check
      _
    $region23: #{tpu_custom_call.1} parent=1 // pred_check_branch
      %45 = sbr.rel (0) target = $region25
    $region24: #{tpu_custom_call.1} parent=1 // pred_region
      %46 = dma.done [#allocation7], 1024
    $region25: #{tpu_custom_call.1} parent=1 // pred_fallthru
      _
    %s48 = sld [smem:[#allocation2]]
    %v49 = vld [vmem:[#allocation3] sm:$0xf]
    %v50 = vld [vmem:[#allocation3 + $0x4] sm:$0xf]
    %v51 = vld [vmem:[#allocation6] sm:$0xff]
    %v52 = vld [vmem:[#allocation6 + $0x8] sm:$0xff]
    %v53 = vld [vmem:[#allocation6 + $0x10] sm:$0xff]
    %v54 = vld [vmem:[#allocation6 + $0x18] sm:$0xff]
    %v55 = vld [vmem:[#allocation6 + $0x20] sm:$0xff]
    %v56 = vld [vmem:[#allocation6 + $0x28] sm:$0xff]
    %v57 = vld [vmem:[#allocation6 + $0x30] sm:$0xff]
    %v58 = vld [vmem:[#allocation6 + $0x38] sm:$0xff]
    %v59 = vld [vmem:[%s3] sm:$0xf]
    %v61 = vlaneseq
    %v62 = vshrl.u32 %v61, 7
    %v63 = vsub.s32 0, %v62
    %v64 = vrot.slane %v59, %v63
    %v65 = vlaneseq
    %v66 = vshrl.u32 %v65, 7
    %v67 = vsub.s32 1, %v66
    %v68 = vrot.slane %v59, %v67
    %v69 = vlaneseq
    %v70 = vshrl.u32 %v69, 7
    %v71 = vsub.s32 2, %v70
    %v72 = vrot.slane %v59, %v71
    %v73 = vlaneseq
    %v74 = vshrl.u32 %v73, 7
    %v75 = vsub.s32 3, %v74
    %v76 = vrot.slane %v59, %v75
    %v83 = vunpack.c.l.b16 %v49
    %v84 = vunpack.c.l.b16 %v50
    %v85 = vpack.c.b16 %v84, %v83
    %v94 = vunpack.c.l.b16 %v51
    %v95 = vunpack.c.h.b16 %v51
    %v96 = vunpack.c.l.b16 %v52
    %v97 = vunpack.c.h.b16 %v52
    %v98 = vunpack.c.l.b16 %v53
    %v99 = vunpack.c.h.b16 %v53
    %v100 = vunpack.c.l.b16 %v54
    %v101 = vunpack.c.h.b16 %v54
    %v102 = vunpack.c.l.b16 %v55
    %v103 = vunpack.c.h.b16 %v55
    %v104 = vunpack.c.l.b16 %v56
    %v105 = vunpack.c.h.b16 %v56
    %v106 = vunpack.c.l.b16 %v57
    %v107 = vunpack.c.h.b16 %v57
    %v108 = vunpack.c.l.b16 %v58
    %v109 = vunpack.c.h.b16 %v58
    %v110 = vpack.c.b16 %v98, %v94
    %v111 = vpack.c.b16 %v99, %v95
    %v112 = vpack.c.b16 %v100, %v96
    %v113 = vpack.c.b16 %v101, %v97
    %v114 = vpack.c.b16 %v106, %v102
    %v115 = vpack.c.b16 %v107, %v103
    %v116 = vpack.c.b16 %v108, %v104
    %v117 = vpack.c.b16 %v109, %v105
    %vm126 = vcmask 261120
    %v128 = vsel %vm126, %v85, 0
    %130 = vmatprep.subr.bf16.mxu0 0
    %131 = vmatpush1.bf16.msra.mxu0 0
    %132 = vmatprep.subr.bf16.mxu0 0
    %133 = vmatpush1.bf16.msra.mxu0 0
    %134 = vmatprep.subr.bf16.mxu0 0
    %135 = vmatpush1.bf16.msra.mxu0 0
    %136 = vmatprep.subr.bf16.mxu0 0
    %137 = vmatpush1.bf16.msra.mxu0 0
    %138 = vmatprep.subr.bf16.mxu0 0
    %139 = vmatpush1.bf16.msra.mxu0 0
    %140 = vmatprep.subr.bf16.mxu0 0
    %141 = vmatpush1.bf16.msra.mxu0 0
    %142 = vmatprep.subr.bf16.mxu0 %v115
    %143 = vmatpush1.bf16.msra.mxu0 %v114
    %144 = vmatprep.subr.bf16.mxu0 %v111
    %145 = vmatpush1.bf16.msra.mxu0 %v110
    %146 = vmatprep.subr.bf16.mxu0 0
    %147 = vmatpush2.bf16.msra.mxu0 0
    %148 = vmatprep.subr.bf16.mxu0 0
    %149 = vmatpush2.bf16.msra.mxu0 0
    %150 = vmatprep.subr.bf16.mxu0 0
    %151 = vmatpush2.bf16.msra.mxu0 0
    %152 = vmatprep.subr.bf16.mxu0 0
    %153 = vmatpush2.bf16.msra.mxu0 0
    %154 = vmatprep.subr.bf16.mxu0 0
    %155 = vmatpush2.bf16.msra.mxu0 0
    %156 = vmatprep.subr.bf16.mxu0 0
    %157 = vmatpush2.bf16.msra.mxu0 0
    %158 = vmatprep.subr.bf16.mxu0 0
    %159 = vmatpush2.bf16.msra.mxu0 0
    %160 = vmatprep.subr.bf16.mxu0 0
    %161 = vmatpush2.bf16.msra.mxu0 0
    %162 = vmatprep.mubr.bf16.mxu0 0
    %163 = vmatmul.mubr.bf16.gmra.mxu0 %v128
    %v164 = vpop.f32.mrf.mxu0
    %v165 = vadd.f32 %v64, %v164
    %v166 = vpop.f32.mrf.mxu0
    %v167 = vadd.f32 %v68, %v166
    %v168 = vpop.f32.mrf.mxu0
    %v169 = vadd.f32 %v64, %v168
    %v170 = vpop.f32.mrf.mxu0
    %v171 = vadd.f32 %v68, %v170
    %172 = vdwg.mxu0
    %173 = vmatprep.subr.bf16.mxu0 0
    %174 = vmatpush1.bf16.msra.mxu0 0
    %175 = vmatprep.subr.bf16.mxu0 0
    %176 = vmatpush1.bf16.msra.mxu0 0
    %177 = vmatprep.subr.bf16.mxu0 0
    %178 = vmatpush1.bf16.msra.mxu0 0
    %179 = vmatprep.subr.bf16.mxu0 0
    %180 = vmatpush1.bf16.msra.mxu0 0
    %181 = vmatprep.subr.bf16.mxu0 0
    %182 = vmatpush1.bf16.msra.mxu0 0
    %183 = vmatprep.subr.bf16.mxu0 0
    %184 = vmatpush1.bf16.msra.mxu0 0
    %185 = vmatprep.subr.bf16.mxu0 %v117
    %186 = vmatpush1.bf16.msra.mxu0 %v116
    %187 = vmatprep.subr.bf16.mxu0 %v113
    %188 = vmatpush1.bf16.msra.mxu0 %v112
    %189 = vmatprep.subr.bf16.mxu0 0
    %190 = vmatpush2.bf16.msra.mxu0 0
    %191 = vmatprep.subr.bf16.mxu0 0
    %192 = vmatpush2.bf16.msra.mxu0 0
    %193 = vmatprep.subr.bf16.mxu0 0
    %194 = vmatpush2.bf16.msra.mxu0 0
    %195 = vmatprep.subr.bf16.mxu0 0
    %196 = vmatpush2.bf16.msra.mxu0 0
    %197 = vmatprep.subr.bf16.mxu0 0
    %198 = vmatpush2.bf16.msra.mxu0 0
    %199 = vmatprep.subr.bf16.mxu0 0
    %200 = vmatpush2.bf16.msra.mxu0 0
    %201 = vmatprep.subr.bf16.mxu0 0
    %202 = vmatpush2.bf16.msra.mxu0 0
    %203 = vmatprep.subr.bf16.mxu0 0
    %204 = vmatpush2.bf16.msra.mxu0 0
    %205 = vmatprep.mubr.bf16.mxu0 0
    %206 = vmatmul.mubr.bf16.gmra.mxu0 %v128
    %v207 = vpop.f32.mrf.mxu0
    %v208 = vadd.f32 %v72, %v207
    %v209 = vpop.f32.mrf.mxu0
    %v210 = vadd.f32 %v76, %v209
    %v211 = vpop.f32.mrf.mxu0
    %v212 = vadd.f32 %v72, %v211
    %v213 = vpop.f32.mrf.mxu0
    %v214 = vadd.f32 %v76, %v213
    %215 = vdwg.mxu0
    %v216 = vstv %s48
    %v217 = vmul.f32 %v165, %v216
    %v218 = vmul.f32 %v167, %v216
    %v219 = vmul.f32 %v208, %v216
    %v220 = vmul.f32 %v210, %v216
    %v221 = vmul.f32 %v169, %v216
    %v222 = vmul.f32 %v171, %v216
    %v223 = vmul.f32 %v212, %v216
    %v224 = vmul.f32 %v214, %v216
    %v225 = vmax.f32 %v217, %v219
    %v226 = vmax.f32 %v218, %v220
    %v227 = vmax.f32 %v225, %v226
    %228 = vmax.xlane.f32.xlu0 %v227
    %v229 = vpop.xlane.xlu0 %228
    %v230 = vmax.f32 %v221, %v223
    %v231 = vmax.f32 %v222, %v224
    %v232 = vmax.f32 %v230, %v231
    %233 = vmax.xlane.f32.xlu0 %v232
    %v234 = vpop.xlane.xlu0 %233
    %v235 = vsub.f32 %v217, %v229
    %v236 = vsub.f32 %v218, %v229
    %v237 = vsub.f32 %v219, %v229
    %v238 = vsub.f32 %v220, %v229
    %v239 = vsub.f32 %v221, %v234
    %v240 = vsub.f32 %v222, %v234
    %v241 = vsub.f32 %v223, %v234
    %v242 = vsub.f32 %v224, %v234
    %v243 = vmul.f32 %v235, 1.442695
    %v244 = vpow.pop %v243
    %v245 = vmul.f32 %v236, 1.442695
    %v246 = vpow.pop %v245
    %v247 = vmul.f32 %v237, 1.442695
    %v248 = vpow.pop %v247
    %v249 = vmul.f32 %v238, 1.442695
    %v250 = vpow.pop %v249
    %v251 = vmul.f32 %v239, 1.442695
    %v252 = vpow.pop %v251
    %v253 = vmul.f32 %v240, 1.442695
    %v254 = vpow.pop %v253
    %v255 = vmul.f32 %v241, 1.442695
    %v256 = vpow.pop %v255
    %v257 = vmul.f32 %v242, 1.442695
    %v258 = vpow.pop %v257
    %v259 = vadd.f32 %v244, %v246
    %v260 = vadd.f32 %v259, %v248
    %v261 = vadd.f32 %v260, %v250
    %262 = vadd.xlane.f32.xlu0 %v261
    %v263 = vpop.xlane.xlu0 %262
    %v264 = vadd.f32 %v252, %v254
    %v265 = vadd.f32 %v264, %v256
    %v266 = vadd.f32 %v265, %v258
    %267 = vadd.xlane.f32.xlu0 %v266
    %v268 = vpop.xlane.xlu0 %267
    %v269 = vlog2.pop %v263
    %v270 = vmul.f32 %v269, 0.6931472
    %v271 = vlog2.pop %v268
    %v272 = vmul.f32 %v271, 0.6931472
    %v273 = vsub.f32 %v235, %v270
    %v274 = vsub.f32 %v236, %v270
    %v275 = vsub.f32 %v237, %v270
    %v276 = vsub.f32 %v238, %v270
    %v277 = vsub.f32 %v239, %v272
    %v278 = vsub.f32 %v240, %v272
    %v279 = vsub.f32 %v241, %v272
    %v280 = vsub.f32 %v242, %v272
    %281 = vst [vmem:[#allocation8] sm:$0xff] %v273
    %282 = vst [vmem:[#allocation8 + $0x8] sm:$0xff] %v274
    %283 = vst [vmem:[#allocation8 + $0x10] sm:$0xff] %v275
    %284 = vst [vmem:[#allocation8 + $0x18] sm:$0xff] %v276
    %285 = vst [vmem:[#allocation8 + $0x20] sm:$0xff] %v277
    %286 = vst [vmem:[#allocation8 + $0x28] sm:$0xff] %v278
    %287 = vst [vmem:[#allocation8 + $0x30] sm:$0xff] %v279
    %288 = vst [vmem:[#allocation8 + $0x38] sm:$0xff] %v280
    // Predicated region
    $region26: #{tpu_custom_call.1} parent=1 // pred_check
      _
    $region27: #{tpu_custom_call.1} parent=1 // pred_check_branch
      %290 = sbr.rel (0) target = $region29
    $region28: #{tpu_custom_call.1} parent=1 // pred_region
      %s292 = ssub.s32 1024, 1024
      %293 = vsyncadd [#allocation5], %s292
      %s294 = sshll.u32 [#allocation8], 4
      %s295 = int_to_ptr.vmem [resolvable:$true] %s294
      %300 = dma.vmem_to_hbm [thread:$0]  %s295, 1024, %s4, [#allocation5], 512, 512, 32
    $region29: #{tpu_custom_call.1} parent=1 // pred_fallthru
      _
    // Predicated region
    $region30: #{tpu_custom_call.1} parent=1 // pred_check
      _
    $region31: #{tpu_custom_call.1} parent=1 // pred_check_branch
      %302 = sbr.rel (0) target = $region33
    $region32: #{tpu_custom_call.1} parent=1 // pred_region
      %303 = dma.done [#allocation5], 1024
    $region33: #{tpu_custom_call.1} parent=1 // pred_fallthru
      _
    %304 = vsyncpa [#allocation4], 1
    %305 = vsyncpa [#allocation7], 1
    %306 = vsyncpa [#allocation5], 1

</llo_original>
